<compile_context>
chip_gen: v5e
topology: v5e:2x2
jax: 0.10.0
libtpu: 0.0.40
codegen_flags: <defaults>
</compile_context>

<pallas_src>
import jax
import jax.numpy as jnp
from jax.experimental import pallas as pl
from jax.experimental.pallas import tpu as pltpu


_LANE = 128
_SUBLANE = 8
_NUM_CORE_SPLITS = 2                      # v7x has 2 TCs; no-op (serial) on v5e/v6e.
_DATA_VMEM_BUDGET = 24 * 1024 * 1024      # bytes of double-buffered tile data
_VMEM_LIMIT_BYTES = 48 * 1024 * 1024      # raised scoped-VMEM limit (safe v5e..v7x)
_MAX_TILE_ROWS = 2048


def _round_up(x, m):
    return (x + m - 1) // m * m


def _dd_partial_kernel(pred_ref, target_ref, count_ref, err_ref):
    """Accumulate exact per-class sample counts and misclassification counts.

    pred_ref:   (TN, Cp) logits tile (class-padded columns hold a huge negative)
    target_ref: (TN, 1)  int32 class ids (-1 for padded rows)
    count_ref:  (8, Cp)  int32 output-resident accumulator (samples per class)
    err_ref:    (8, Cp)  int32 output-resident accumulator (misses per class)
    """
    i = pl.program_id(1)

    @pl.when(i == 0)
    def _():
        count_ref[...] = jnp.zeros_like(count_ref)
        err_ref[...] = jnp.zeros_like(err_ref)

    pred = pred_ref[...]                                  # (TN, Cp)
    target = target_ref[...]                              # (TN, 1) int32

    tn, cp = pred.shape
    class_ids = jax.lax.broadcasted_iota(jnp.int32, (1, cp), 1)   # (1, Cp)

    # one-hot of target via broadcast compare; padded rows (target == -1) -> all 0.
    onehot = target == class_ids                          # (TN, Cp) bool

    # argmax along the class axis, smallest index on ties (matches torch.argmax).
    # TODO(synk): jnp.argmax(pred, -1) would be a single variadic reduce; the
    # max/compare/min-sentinel form is kept because it lowers cleanly on Mosaic.
    pmax = jnp.max(pred, axis=-1, keepdims=True)          # (TN, 1)
    argmax_idx = jnp.min(
        jnp.where(pred == pmax, class_ids, jnp.int32(cp)),
        axis=-1, keepdims=True)                           # (TN, 1) int32
    miss = argmax_idx != target                           # (TN, 1) bool, per-row flag

    cnt_i = onehot.astype(jnp.int32)                            # (TN, Cp)
    err_i = jnp.logical_and(onehot, miss).astype(jnp.int32)     # (TN, Cp)

    # Sublane-grouped accumulation: (TN, Cp) -> (8, Cp) with pure VPU vreg adds;
    # the final 8 -> 1 cross-sublane reduce happens once in the wrapper.
    count_ref[...] += jnp.sum(cnt_i.reshape(tn // _SUBLANE, _SUBLANE, cp), axis=0)
    err_ref[...] += jnp.sum(err_i.reshape(tn // _SUBLANE, _SUBLANE, cp), axis=0)


def _pick_tile_rows(n, c_pad, itemsize):
    # double-buffered pred tile + double-buffered (lane-padded) target tile
    per_row = 2 * (c_pad * itemsize + _LANE * 4)
    tn = _DATA_VMEM_BUDGET // per_row
    tn = max(_SUBLANE, min(int(tn), _MAX_TILE_ROWS))
    tn = (tn // _SUBLANE) * _SUBLANE
    tn = min(tn, max(_SUBLANE, _round_up(n, _SUBLANE)))
    return tn


def dd_weight_forward(pred, target, weight_init, beta):
    """Pallas implementation of DD_weight(weight_init, beta).forward(pred, target)."""
    n, c = pred.shape
    dtype = pred.dtype

    c_pad = _round_up(c, _LANE)
    tn = _pick_tile_rows(n, c_pad, jnp.dtype(dtype).itemsize)

    tiles_total = _round_up(max(1, pl.cdiv(n, tn)), _NUM_CORE_SPLITS)
    tiles_per_split = tiles_total // _NUM_CORE_SPLITS
    n_pad = tiles_total * tn

    # Pad to lane-dense class axis / tile-aligned batch axis.
    if (n_pad, c_pad) != (n, c):
        neg = jnp.asarray(jnp.finfo(dtype).min, dtype)
        pred_p = jnp.full((n_pad, c_pad), neg, dtype).at[:n, :c].set(pred)
    else:
        pred_p = pred
    if n_pad != n:
        target_p = jnp.full((n_pad, 1), -1, jnp.int32).at[:n, 0].set(
            target.astype(jnp.int32))
    else:
        target_p = target.reshape(n, 1).astype(jnp.int32)

    counts, errors = pl.pallas_call(
        _dd_partial_kernel,
        out_shape=(
            jax.ShapeDtypeStruct((_NUM_CORE_SPLITS * _SUBLANE, c_pad), jnp.int32),
            jax.ShapeDtypeStruct((_NUM_CORE_SPLITS * _SUBLANE, c_pad), jnp.int32),
        ),
        grid_spec=pltpu.PrefetchScalarGridSpec(
            num_scalar_prefetch=0,
            grid=(_NUM_CORE_SPLITS, tiles_per_split),
            in_specs=[
                pl.BlockSpec((tn, c_pad),
                             lambda s, i: (s * tiles_per_split + i, 0)),
                pl.BlockSpec((tn, 1),
                             lambda s, i: (s * tiles_per_split + i, 0)),
            ],
            out_specs=[
                pl.BlockSpec((_SUBLANE, c_pad), lambda s, i: (s, 0)),
                pl.BlockSpec((_SUBLANE, c_pad), lambda s, i: (s, 0)),
            ],
        ),
        compiler_params=pltpu.CompilerParams(
            dimension_semantics=("parallel", "arbitrary"),
            vmem_limit_bytes=_VMEM_LIMIT_BYTES,
        ),
    )(pred_p, target_p)

    # Tiny (C,)-sized finalize: combine partials, error rate, beta update.
    count = jnp.sum(counts, axis=0)[:c].astype(jnp.float32)
    errs = jnp.sum(errors, axis=0)[:c].astype(jnp.float32)
    err_rate = jnp.where(count > 0.0, errs / jnp.maximum(count, 1.0), 0.0)
    w = weight_init.astype(jnp.float32)
    out = jnp.where(err_rate != 0.0, beta * w + err_rate, w * (1.0 + beta))
    return out.astype(dtype)


def _reference(pred, target, weight_init, beta):
    """Pure-JAX reference mirroring the PyTorch module (correctness check)."""
    c = weight_init.shape[0]
    logp = jax.nn.log_softmax(pred, axis=-1)
    pred_cls = jnp.argmax(logp, axis=-1)
    out = []
    for i in range(c):
        mask = target == i
        cnt = jnp.sum(mask)
        errs = jnp.sum(mask & (pred_cls != i)).astype(jnp.float32)
        e = jnp.where(cnt > 0, errs / jnp.maximum(cnt, 1).astype(jnp.float32), 0.0)
        w = weight_init[i]
        out.append(jnp.where(e != 0.0, beta * w + e, w * (1.0 + beta)))
    return jnp.stack(out).astype(pred.dtype)


if __name__ == "__main__":
    base = jax.random.PRNGKey(0)
    beta = 0.9

    # Small shapes; second case exercises class padding (C not multiple of 128),
    # batch padding and classes that may have zero samples.
    for idx, (N, C) in enumerate([(8, 4), (64, 5)]):
        k_pred, k_tgt = jax.random.split(jax.random.fold_in(base, idx))
        pred = jax.random.normal(k_pred, (N, C), dtype=jnp.float32)
        target = jax.random.randint(k_tgt, (N,), 0, C, dtype=jnp.int32)
        weight_init = jnp.linspace(0.1, 1.0, C, dtype=jnp.float32)

        out = jax.block_until_ready(
            dd_weight_forward(pred, target, weight_init, beta))
        ref = _reference(pred, target, weight_init, beta)
        assert jnp.allclose(out, ref, atol=1e-6, rtol=1e-6), (N, C, out, ref)

    print("KERNEL_OK")
</pallas_src>

<mosaic_0001>
module attributes {stable_mosaic.version = 11 : i64} {
  func.func @_dd_partial_kernel(%arg0: i32, %arg1: i32, %arg2: memref<8x128xf32, #tpu.memory_space<vmem>>, %arg3: memref<8x1xi32, #tpu.memory_space<vmem>>, %arg4: memref<8x128xi32, #tpu.memory_space<vmem>>, %arg5: memref<8x128xi32, #tpu.memory_space<vmem>>) attributes {dimension_semantics = [#tpu.dimension_semantics<parallel>, #tpu.dimension_semantics<arbitrary>], iteration_bounds = array<i64: 2, 1>, scalar_prefetch = 0 : i64, scratch_operands = 0 : i64, tpu.core_type = #tpu.core_type<tc>, window_params = [{transform_indices = @transform_0, window_bounds = array<i64: 8, 128>}, {transform_indices = @transform_1, window_bounds = array<i64: 8, 1>}, {transform_indices = @transform_2, window_bounds = array<i64: 8, 128>}, {transform_indices = @transform_3, window_bounds = array<i64: 8, 128>}]} {
    %c0_i32 = arith.constant 0 : i32
    %0 = arith.cmpi eq, %arg1, %c0_i32 : i32
    %1 = arith.extui %0 : i1 to i32
    %c0_i32_0 = arith.constant 0 : i32
    %2 = arith.cmpi ne, %1, %c0_i32_0 : i32
    scf.if %2 {
      %c0_i32_15 = arith.constant 0 : i32
      %34 = vector.broadcast %c0_i32_15 : i32 to vector<8x128xi32>
      %c0_16 = arith.constant 0 : index
      %c0_17 = arith.constant 0 : index
      %35 = vector.load %arg4[%c0_16, %c0_17] : memref<8x128xi32, #tpu.memory_space<vmem>>, vector<8x128xi32>
      tpu.vector_store %arg4[%c0_16, %c0_17], %34 {strides = array<i32>} : memref<8x128xi32, #tpu.memory_space<vmem>>, vector<8x128xi32>,
      %c0_i32_18 = arith.constant 0 : i32
      %36 = vector.broadcast %c0_i32_18 : i32 to vector<8x128xi32>
      %c0_19 = arith.constant 0 : index
      %c0_20 = arith.constant 0 : index
      %37 = vector.load %arg5[%c0_19, %c0_20] : memref<8x128xi32, #tpu.memory_space<vmem>>, vector<8x128xi32>
      tpu.vector_store %arg5[%c0_19, %c0_20], %36 {strides = array<i32>} : memref<8x128xi32, #tpu.memory_space<vmem>>, vector<8x128xi32>,
    } else {
    }
    %c0 = arith.constant 0 : index
    %c0_1 = arith.constant 0 : index
    %3 = vector.load %arg2[%c0, %c0_1] : memref<8x128xf32, #tpu.memory_space<vmem>>, vector<8x128xf32>
    %c0_2 = arith.constant 0 : index
    %c0_3 = arith.constant 0 : index
    %4 = vector.load %arg3[%c0_2, %c0_3] : memref<8x1xi32, #tpu.memory_space<vmem>>, vector<8x1xi32>
    %5 = tpu.iota {dimensions = array<i32: 1>} : vector<1x128xi32>
    %6 = vector.broadcast %4 : vector<8x1xi32> to vector<8x128xi32>
    %7 = vector.broadcast %5 : vector<1x128xi32> to vector<8x128xi32>
    %8 = arith.cmpi eq, %6, %7 : vector<8x128xi32>
    %cst = arith.constant dense<0xFF800000> : vector<8xf32>
    %9 = vector.multi_reduction <maximumf>, %3, %cst [1] : vector<8x128xf32> to vector<8xf32>
    %10 = vector.shape_cast %9 : vector<8xf32> to vector<8x1xf32>
    %11 = vector.broadcast %10 : vector<8x1xf32> to vector<8x128xf32>
    %12 = arith.cmpf oeq, %3, %11 : vector<8x128xf32>
    %c128_i32 = arith.constant 128 : i32
    %13 = vector.shape_cast %5 : vector<1x128xi32> to vector<1x128xi32>
    %14 = vector.broadcast %13 : vector<1x128xi32> to vector<8x128xi32>
    %15 = vector.broadcast %c128_i32 : i32 to vector<8x128xi32>
    %16 = arith.select %12, %14, %15 : vector<8x128xi1>, vector<8x128xi32>
    %cst_4 = arith.constant dense<2147483647> : vector<8xi32>
    %17 = vector.multi_reduction <minsi>, %16, %cst_4 [1] : vector<8x128xi32> to vector<8xi32>
    %18 = vector.shape_cast %17 : vector<8xi32> to vector<8x1xi32>
    %19 = arith.cmpi ne, %18, %4 : vector<8x1xi32>
    %20 = arith.extui %8 : vector<8x128xi1> to vector<8x128xi32>
    %21 = vector.broadcast %19 : vector<8x1xi1> to vector<8x128xi1>
    %22 = arith.andi %8, %21 : vector<8x128xi1>
    %23 = arith.extui %22 : vector<8x128xi1> to vector<8x128xi32>
    %c0_5 = arith.constant 0 : index
    %c0_6 = arith.constant 0 : index
    %24 = vector.load %arg4[%c0_5, %c0_6] : memref<8x128xi32, #tpu.memory_space<vmem>>, vector<8x128xi32>
    %25 = vector.shape_cast %20 : vector<8x128xi32> to vector<1x8x128xi32>
    %cst_7 = arith.constant dense<0> : vector<8x128xi32>
    %26 = vector.multi_reduction <add>, %25, %cst_7 [0] : vector<1x8x128xi32> to vector<8x128xi32>
    %27 = arith.addi %24, %26 : vector<8x128xi32>
    %c0_8 = arith.constant 0 : index
    %c0_9 = arith.constant 0 : index
    %28 = vector.load %arg4[%c0_8, %c0_9] : memref<8x128xi32, #tpu.memory_space<vmem>>, vector<8x128xi32>
    tpu.vector_store %arg4[%c0_8, %c0_9], %27 {strides = array<i32>} : memref<8x128xi32, #tpu.memory_space<vmem>>, vector<8x128xi32>,
    %c0_10 = arith.constant 0 : index
    %c0_11 = arith.constant 0 : index
    %29 = vector.load %arg5[%c0_10, %c0_11] : memref<8x128xi32, #tpu.memory_space<vmem>>, vector<8x128xi32>
    %30 = vector.shape_cast %23 : vector<8x128xi32> to vector<1x8x128xi32>
    %cst_12 = arith.constant dense<0> : vector<8x128xi32>
    %31 = vector.multi_reduction <add>, %30, %cst_12 [0] : vector<1x8x128xi32> to vector<8x128xi32>
    %32 = arith.addi %29, %31 : vector<8x128xi32>
    %c0_13 = arith.constant 0 : index
    %c0_14 = arith.constant 0 : index
    %33 = vector.load %arg5[%c0_13, %c0_14] : memref<8x128xi32, #tpu.memory_space<vmem>>, vector<8x128xi32>
    tpu.vector_store %arg5[%c0_13, %c0_14], %32 {strides = array<i32>} : memref<8x128xi32, #tpu.memory_space<vmem>>, vector<8x128xi32>,
    return
  }
  func.func @transform_0(%arg0: i32, %arg1: i32) -> (i32, i32) {
    %c1_i32 = arith.constant 1 : i32
    %0 = arith.muli %arg0, %c1_i32 : i32
    %1 = arith.addi %0, %arg1 : i32
    %c0_i32 = arith.constant 0 : i32
    %c0_i32_0 = arith.constant 0 : i32
    return %1, %c0_i32 : i32, i32
  }
  func.func @transform_1(%arg0: i32, %arg1: i32) -> (i32, i32) {
    %c1_i32 = arith.constant 1 : i32
    %0 = arith.muli %arg0, %c1_i32 : i32
    %1 = arith.addi %0, %arg1 : i32
    %c0_i32 = arith.constant 0 : i32
    %c0_i32_0 = arith.constant 0 : i32
    return %1, %c0_i32 : i32, i32
  }
  func.func @transform_2(%arg0: i32, %arg1: i32) -> (i32, i32) {
    %c0_i32 = arith.constant 0 : i32
    %c0_i32_0 = arith.constant 0 : i32
    return %arg0, %c0_i32 : i32, i32
  }
  func.func @transform_3(%arg0: i32, %arg1: i32) -> (i32, i32) {
    %c0_i32 = arith.constant 0 : i32
    %c0_i32_0 = arith.constant 0 : i32
    return %arg0, %c0_i32 : i32, i32
  }
}

</mosaic_0001>

<llo_original>
// kernel: tpu_custom_call.1
$region0: #{tpu_custom_call.1}
  #allocation0 [shape = 'u32[]', space=smem, size = 0x4, offset = 0x4, fixed_abs, tag = 'smem constant byte address 0x4 - core index']
  #allocation1 [shape = 'u32[72,128]{1,0:T(1,128)}', space=vmem, size = 0x9000, scoped, tag = 'internal scratch']
  %s0 = inlined_call_operand.vmem [shape: f32[16,128], index: 0, kind: input, shape index: {}]
  %s1 = inlined_call_operand.vmem [shape: s32[16,1], index: 1, kind: input, shape index: {}]
  %s2 = inlined_call_operand.hbm [shape: s32[16,128], index: 2, kind: output, shape index: {0}]
  %s3 = inlined_call_operand.hbm [shape: s32[16,128], index: 3, kind: output, shape index: {1}]
  %4 = xla_tuple %s2, %s3
  %s5 = sld [smem:[#allocation0]]
  $region53: #{tpu_custom_call.1} parent=0
    _
  %s7 = ssub.s32 1, %s5
  %s8 = scalar_select 0, %s7, %s5
  $region1: #{tpu_custom_call.1} parent=0
    #allocation2 [shape = 'u8[8192]{0}', space=vmem, size = 0x2000, scoped, tag = 'output window, operand 0']
    #allocation3 [shape = 's32[2]{0}', space=sflag, size = 0x8, scoped, tag = 'scoped memory for tpu_custom_call.1']
    #allocation4 [shape = 'u8[8192]{0}', space=vmem, size = 0x2000, scoped, tag = 'output window, operand 1']
    #allocation5 [shape = 's32[2]{0}', space=sflag, size = 0x8, scoped, tag = 'scoped memory for tpu_custom_call.1']
    %9 = vsyncpa [#allocation3], 0
    %s10 = scalar_lea.sflag [#allocation3], 1
    %11 = vsyncpa %s10, 0
    %12 = vsyncpa [#allocation5], 0
    %s13 = scalar_lea.sflag [#allocation5], 1
    %14 = vsyncpa %s13, 0
    loop: start=0, step=1, limit=4
    $region2: #{tpu_custom_call.1} parent=1 // loop_pre_header
      _
    $region3: #{tpu_custom_call.1} parent=1 // loop_header
      %s16 = sphi 0, %s20
      %p17 = scmp.ge.s32.totalorder %s16, 4
      %s23 = sphi 0, %s35
      %s24 = sphi 0, %s31
      %s25 = sphi 0, %s23
      %s26 = sphi 0, %s24
      %s27 = sphi 0, %s25
      %s28 = sphi 0, %s26
      %s40 = sphi 0, %s42
      %s43 = sphi 0, %s40
      %s44 = sphi 0, %s43
      %s60 = sphi 0, %s44
      %s68 = sphi 0, %s70
      %s71 = sphi 0, %s68
      %s72 = sphi 0, %s71
      %s88 = sphi 0, %s72
      %s94 = sphi 0, %s96
      %s97 = sphi 0, %s94
      %s98 = sphi 0, %s97
      %s114 = sphi 0, %s98
      %s120 = sphi 0, %s122
      %s123 = sphi 0, %s120
      %s124 = sphi 0, %s123
      %s140 = sphi 0, %s124
    $region4: #{tpu_custom_call.1} parent=1 // loop_header_branch
      %19 = sbr.rel (%p17) target = $region8
    $region5: #{tpu_custom_call.1} parent=1 // loop_body
      %s21 = ssub.s32 %s16, 1
      %s22 = ssub.s32 %s16, 2
      %s29 = sadd.s32 1, %s24
      %p30 = scmp.ge.s32.totalorder %s29, 1
      %s31 = scalar_select %p30, 0, %s29
      %s32 = sadd.s32 1, %s23
      %s33 = scalar_select %p30, %s32, %s23
      %p34 = scmp.ge.s32.totalorder %s33, 2
      %s35 = scalar_select %p34, 0, %s33
      %s36 = sadd.s32 %s23, %s24
      %s37 = sadd.s32 %s35, %s31
      %s38 = ssub.s32 %s36, %s37
      %p39 = scmp.eq.s32.totalorder %s38, 0
      %s41 = sadd.s32 %s40, 1
      %s42 = scalar_select %p39, %s40, %s41
      %p45 = pneg %p39
      %p46 = scmp.eq.s32.totalorder %s16, 1
      %p47 = por %p45, %p46
      %p48 = scmp.ne.s32.totalorder %s40, %s43
      %p49 = scmp.eq.s32.totalorder %s16, 0
      %p50 = por %p48, %p49
      %p51 = scmp.ne.s32.totalorder %s40, %s43
      %p52 = scmp.eq.s32.totalorder %s21, 1
      %p53 = por %p51, %p52
      %p54 = scmp.ne.s32.totalorder %s43, %s44
      %p55 = scmp.eq.s32.totalorder %s21, 0
      %p56 = por %p54, %p55
      %p57 = scmp.ne.s32.totalorder %s43, %s44
      %p58 = scmp.eq.s32.totalorder %s22, 1
      %p59 = por %p57, %p58
      %p61 = scmp.ne.s32.totalorder %s44, %s60
      %p62 = scmp.eq.s32.totalorder %s22, 0
      %p63 = por %p61, %p62
      %s64 = sadd.s32 %s23, %s24
      %s65 = sadd.s32 %s35, %s31
      %s66 = ssub.s32 %s64, %s65
      %p67 = scmp.eq.s32.totalorder %s66, 0
      %s69 = sadd.s32 %s68, 1
      %s70 = scalar_select %p67, %s68, %s69
      %p73 = pneg %p67
      %p74 = scmp.eq.s32.totalorder %s16, 1
      %p75 = por %p73, %p74
      %p76 = scmp.ne.s32.totalorder %s68, %s71
      %p77 = scmp.eq.s32.totalorder %s16, 0
      %p78 = por %p76, %p77
      %p79 = scmp.ne.s32.totalorder %s68, %s71
      %p80 = scmp.eq.s32.totalorder %s21, 1
      %p81 = por %p79, %p80
      %p82 = scmp.ne.s32.totalorder %s71, %s72
      %p83 = scmp.eq.s32.totalorder %s21, 0
      %p84 = por %p82, %p83
      %p85 = scmp.ne.s32.totalorder %s71, %s72
      %p86 = scmp.eq.s32.totalorder %s22, 1
      %p87 = por %p85, %p86
      %p89 = scmp.ne.s32.totalorder %s72, %s88
      %p90 = scmp.eq.s32.totalorder %s22, 0
      %p91 = por %p89, %p90
      %s92 = ssub.s32 %s23, %s35
      %p93 = scmp.eq.s32.totalorder %s92, 0
      %s95 = sadd.s32 %s94, 1
      %s96 = scalar_select %p93, %s94, %s95
      %p99 = pneg %p93
      %p100 = scmp.eq.s32.totalorder %s16, 1
      %p101 = por %p99, %p100
      %p102 = scmp.ne.s32.totalorder %s94, %s97
      %p103 = scmp.eq.s32.totalorder %s16, 0
      %p104 = por %p102, %p103
      %p105 = scmp.ne.s32.totalorder %s94, %s97
      %p106 = scmp.eq.s32.totalorder %s21, 1
      %p107 = por %p105, %p106
      %p108 = scmp.ne.s32.totalorder %s97, %s98
      %p109 = scmp.eq.s32.totalorder %s21, 0
      %p110 = por %p108, %p109
      %p111 = scmp.ne.s32.totalorder %s97, %s98
      %p112 = scmp.eq.s32.totalorder %s22, 1
      %p113 = por %p111, %p112
      %p115 = scmp.ne.s32.totalorder %s98, %s114
      %p116 = scmp.eq.s32.totalorder %s22, 0
      %p117 = por %p115, %p116
      %s118 = ssub.s32 %s23, %s35
      %p119 = scmp.eq.s32.totalorder %s118, 0
      %s121 = sadd.s32 %s120, 1
      %s122 = scalar_select %p119, %s120, %s121
      %p125 = pneg %p119
      %p126 = scmp.eq.s32.totalorder %s16, 1
      %p127 = por %p125, %p126
      %p128 = scmp.ne.s32.totalorder %s120, %s123
      %p129 = scmp.eq.s32.totalorder %s16, 0
      %p130 = por %p128, %p129
      %p131 = scmp.ne.s32.totalorder %s120, %s123
      %p132 = scmp.eq.s32.totalorder %s21, 1
      %p133 = por %p131, %p132
      %p134 = scmp.ne.s32.totalorder %s123, %s124
      %p135 = scmp.eq.s32.totalorder %s21, 0
      %p136 = por %p134, %p135
      %p137 = scmp.ne.s32.totalorder %s123, %s124
      %p138 = scmp.eq.s32.totalorder %s22, 1
      %p139 = por %p137, %p138
      %p141 = scmp.ne.s32.totalorder %s124, %s140
      %p142 = scmp.eq.s32.totalorder %s22, 0
      %p143 = por %p141, %p142
      %p144 = scmp.le.s32.totalorder 1, %s16
      %p145 = scmp.lt.s32.totalorder %s16, 3
      %p146 = pnand %p144, %p145
      %p147 = pneg %p146
      // Predicated region
      $region9: #{tpu_custom_call.1} parent=5 // pred_check
        _
      $region10: #{tpu_custom_call.1} parent=5 // pred_check_branch
        %149 = sbr.rel (%p146) target = $region12
      $region11: #{tpu_custom_call.1} parent=5 // pred_region
        %s150 = ssub.s32 %s16, 1
      $region12: #{tpu_custom_call.1} parent=5 // pred_fallthru
        _
      %p151 = scmp.lt.s32.totalorder %s16, 2
      // Predicated region
      $region13: #{tpu_custom_call.1} parent=5 // pred_check
        %p152 = pneg %p151
      $region14: #{tpu_custom_call.1} parent=5 // pred_check_branch
        %154 = sbr.rel (%p152) target = $region16
      $region15: #{tpu_custom_call.1} parent=5 // pred_region
        // Predicated region
        $region17: #{tpu_custom_call.1} parent=15 // pred_check
          %p155 = pneg %p50
        $region18: #{tpu_custom_call.1} parent=15 // pred_check_branch
          %157 = sbr.rel (%p155) target = $region20
        $region19: #{tpu_custom_call.1} parent=15 // pred_region
          %s158 = sadd.s32 %s23, %s24
          %p159 = scmp.lt.s32.totalorder %s158, 1
          %s160 = scalar_select %p159, %s158, 1
          %s161 = smul.addr %s160, 8
          %s162 = scalar_lea.vmem %s0, %s161
          %s163 = sadd.s32 %s23, %s24
        $region20: #{tpu_custom_call.1} parent=15 // pred_fallthru
          _
        // Predicated region
        $region21: #{tpu_custom_call.1} parent=15 // pred_check
          %p164 = pneg %p78
        $region22: #{tpu_custom_call.1} parent=15 // pred_check_branch
          %166 = sbr.rel (%p164) target = $region24
        $region23: #{tpu_custom_call.1} parent=15 // pred_region
          %s167 = sadd.s32 %s23, %s24
          %p168 = scmp.lt.s32.totalorder %s167, 1
          %s169 = scalar_select %p168, %s167, 1
          %s170 = smul.addr %s169, 8
          %s171 = scalar_lea.vmem %s1, %s170
          %s172 = sadd.s32 %s23, %s24
        $region24: #{tpu_custom_call.1} parent=15 // pred_fallthru
          _
      $region16: #{tpu_custom_call.1} parent=5 // pred_fallthru
        _
      %p173 = scmp.le.s32.totalorder 1, %s16
      %p174 = scmp.lt.s32.totalorder %s16, 3
      %p175 = pnand %p173, %p174
      %p176 = pneg %p175
      // Predicated region
      $region25: #{tpu_custom_call.1} parent=5 // pred_check
        _
      $region26: #{tpu_custom_call.1} parent=5 // pred_check_branch
        %178 = sbr.rel (%p175) target = $region28
      $region27: #{tpu_custom_call.1} parent=5 // pred_region
        %s179 = ssub.s32 %s16, 1
        %s180 = sadd.s32 %s25, %s26
        %p181 = scmp.lt.s32.totalorder %s180, 1
        %s182 = scalar_select %p181, %s180, 1
        %s183 = smul.addr %s182, 8
        %s184 = scalar_lea.vmem %s0, %s183
        %p185 = pneg %p56
        %p186 = pneg %p53
        %s187 = sadd.s32 %s25, %s26
        %p188 = scmp.lt.s32.totalorder %s187, 1
        %s189 = scalar_select %p188, %s187, 1
        %s190 = smul.addr %s189, 8
        %s191 = scalar_lea.vmem %s1, %s190
        %p192 = pneg %p84
        %p193 = pneg %p81
        %p194 = pneg %p110
        %p195 = pneg %p107
        %s196 = sand.u32 %s97, 1
        %s197 = scalar_lea.sflag [#allocation3], %s196
        %s198 = sand.u32 %s97, 1
        %s199 = smul.addr %s198, 8
        %s200 = scalar_lea.vmem [#allocation2], %s199
        %p201 = pneg %p136
        %p202 = pneg %p133
        %s203 = sand.u32 %s123, 1
        %s204 = scalar_lea.sflag [#allocation5], %s203
        %s205 = sand.u32 %s123, 1
        %s206 = smul.addr %s205, 8
        %s207 = scalar_lea.vmem [#allocation4], %s206
        %s208 = sadd.s32 %s25, %s26
        %p209 = scmp.lt.s32.totalorder %s208, 1
        %s210 = scalar_select %p209, %s208, 1
        %s211 = smul.addr %s210, 8
        %s212 = scalar_lea.vmem %s0, %s211
        %s213 = sadd.s32 %s25, %s26
        %s214 = sadd.s32 %s25, %s26
        %p215 = scmp.lt.s32.totalorder %s214, 1
        %s216 = scalar_select %p215, %s214, 1
        %s217 = smul.addr %s216, 8
        %s218 = scalar_lea.vmem %s1, %s217
        %s219 = sadd.s32 %s25, %s26
        %p220 = scmp.eq.s32.totalorder %s26, 0
        // Predicated region
        $region29: #{tpu_custom_call.1} parent=27 // pred_check
          %p221 = pneg %p220
        $region30: #{tpu_custom_call.1} parent=27 // pred_check_branch
          %223 = sbr.rel (%p221) target = $region32
        $region31: #{tpu_custom_call.1} parent=27 // pred_region
          %224 = vst [vmem:[%s200] sm:$0xff] 0
          %225 = vst [vmem:[%s207] sm:$0xff] 0
        $region32: #{tpu_custom_call.1} parent=27 // pred_fallthru
          _
        %v226 = vld [vmem:[%s212] sm:$0xff]
        %v227 = vld [vmem:[%s218] sm:$0xff]
        %v228 = vlaneseq
        %v229 = vand.u32 %v228, 127
        %230 = vset.pattern.permute.xlu0 0
        %231 = vperm.xlu0 %230, %v227
        %v232 = vpop.permute.xlu0 %231
        %vm233 = vcmp.eq.s32.totalorder %v232, %v229
        %234 = vmax.xlane.f32.xlu0 %v226
        %v235 = vpop.xlane.xlu0 %234
        %vm236 = vcmp.eq.f32.partialorder %v226, %v235
        %v237 = vsel %vm236, %v229, 128
        %v238 = vand.u32 %v237, 65535
        %v239 = vshra.s32 %v237, 16
        %v240 = vcvt.s32.f32 %v238
        %v241 = vcvt.s32.f32 %v239
        %242 = vmin.xlane.f32.xlu0 %v241
        %v243 = vpop.xlane.xlu0 %242
        %vm244 = vcmp.eq.f32.partialorder %v241, %v243
        %v245 = vsel %vm244, %v240, inf
        %246 = vmin.xlane.f32.xlu0 %v245
        %v247 = vpop.xlane.xlu0 %246
        %v248 = vcvt.f32.s32 %v247
        %v249 = vcvt.f32.s32 %v243
        %v250 = vshll.u32 %v249, 16
        %v251 = vadd.s32 %v250, %v248
        %vm252 = vcmp.ne.s32.totalorder %v251, %v227
        %v253 = vsel %vm233, 1, 0
        %v254 = vsel %vm252, 1, 0
        %255 = vset.pattern.permute.xlu0 0
        %256 = vperm.xlu0 %255, %v254
        %v257 = vpop.permute.xlu0 %256
        %vm258 = vcmp.eq.s32.totalorder %v257, 1
        %vm259 = vmand %vm233, %vm258
        %v260 = vsel %vm259, 1, 0
        %v261 = vld [vmem:[%s200] sm:$0xff]
        %v262 = vadd.s32 %v261, %v253
        %263 = vst [vmem:[%s200] sm:$0xff] %v262
        %v264 = vld [vmem:[%s207] sm:$0xff]
        %v265 = vadd.s32 %v264, %v260
        %266 = vst [vmem:[%s207] sm:$0xff] %v265
        %s267 = sand.u32 %s97, 1
        %s268 = scalar_lea.sflag [#allocation3], %s267
        %s269 = sand.u32 %s97, 1
        %s270 = smul.addr %s269, 8
        %s271 = scalar_lea.vmem [#allocation2], %s270
        %s272 = sand.u32 %s123, 1
        %s273 = scalar_lea.sflag [#allocation5], %s272
        %s274 = sand.u32 %s123, 1
        %s275 = smul.addr %s274, 8
        %s276 = scalar_lea.vmem [#allocation4], %s275
        // Predicated region
        $region33: #{tpu_custom_call.1} parent=27 // pred_check
          %p277 = pneg %p107
        $region34: #{tpu_custom_call.1} parent=27 // pred_check_branch
          %279 = sbr.rel (%p277) target = $region36
        $region35: #{tpu_custom_call.1} parent=27 // pred_region
          %281 = vsyncadd %s268, 0
          %s282 = smul.addr %s25, 8
          %s283 = scalar_lea.hbm %s2, %s282
          %s285 = sshll.u32 %s271, 4
          %s286 = int_to_ptr.vmem [resolvable:$true] %s285
          %s287 = sshll.u32 %s283, 4
          %s288 = int_to_ptr.hbm [resolvable:$true] %s287
          %290 = dma.vmem_to_hbm [thread:$0]  %s286, 128, %s288, %s268
        $region36: #{tpu_custom_call.1} parent=27 // pred_fallthru
          _
        // Predicated region
        $region37: #{tpu_custom_call.1} parent=27 // pred_check
          %p291 = pneg %p133
        $region38: #{tpu_custom_call.1} parent=27 // pred_check_branch
          %293 = sbr.rel (%p291) target = $region40
        $region39: #{tpu_custom_call.1} parent=27 // pred_region
          %295 = vsyncadd %s273, 0
          %s296 = smul.addr %s25, 8
          %s297 = scalar_lea.hbm %s3, %s296
          %s299 = sshll.u32 %s276, 4
          %s300 = int_to_ptr.vmem [resolvable:$true] %s299
          %s301 = sshll.u32 %s297, 4
          %s302 = int_to_ptr.hbm [resolvable:$true] %s301
          %304 = dma.vmem_to_hbm [thread:$0]  %s300, 128, %s302, %s273
        $region40: #{tpu_custom_call.1} parent=27 // pred_fallthru
          _
      $region28: #{tpu_custom_call.1} parent=5 // pred_fallthru
        _
      %p305 = scmp.le.s32.totalorder 2, %s16
      // Predicated region
      $region41: #{tpu_custom_call.1} parent=5 // pred_check
        %p306 = pneg %p305
      $region42: #{tpu_custom_call.1} parent=5 // pred_check_branch
        %308 = sbr.rel (%p306) target = $region44
      $region43: #{tpu_custom_call.1} parent=5 // pred_region
        %s309 = ssub.s32 %s16, 2
        // Predicated region
        $region45: #{tpu_custom_call.1} parent=43 // pred_check
          %p310 = pneg %p113
        $region46: #{tpu_custom_call.1} parent=43 // pred_check_branch
          %312 = sbr.rel (%p310) target = $region48
        $region47: #{tpu_custom_call.1} parent=43 // pred_region
          %s313 = sand.u32 %s98, 1
          %s314 = scalar_lea.sflag [#allocation3], %s313
          %s315 = sand.u32 %s98, 1
          %s316 = smul.addr %s315, 8
          %s317 = scalar_lea.vmem [#allocation2], %s316
          %319 = dma.done %s314, 128
        $region48: #{tpu_custom_call.1} parent=43 // pred_fallthru
          _
        // Predicated region
        $region49: #{tpu_custom_call.1} parent=43 // pred_check
          %p320 = pneg %p139
        $region50: #{tpu_custom_call.1} parent=43 // pred_check_branch
          %322 = sbr.rel (%p320) target = $region52
        $region51: #{tpu_custom_call.1} parent=43 // pred_region
          %s323 = sand.u32 %s124, 1
          %s324 = scalar_lea.sflag [#allocation5], %s323
          %s325 = sand.u32 %s124, 1
          %s326 = smul.addr %s325, 8
          %s327 = scalar_lea.vmem [#allocation4], %s326
          %329 = dma.done %s324, 128
        $region52: #{tpu_custom_call.1} parent=43 // pred_fallthru
          _
      $region44: #{tpu_custom_call.1} parent=5 // pred_fallthru
        _
    $region6: #{tpu_custom_call.1} parent=1 // loop_footer
      %s20 = sadd.s32 1, %s16
    $region7: #{tpu_custom_call.1} parent=1 // loop_footer_branch
      %15 = sbr.rel target = $region3
    $region8: #{tpu_custom_call.1} parent=1 // loop_exit
      _
    %330 = vsyncpa [#allocation3], 1
    %s331 = scalar_lea.sflag [#allocation3], 1
    %332 = vsyncpa %s331, 1
    %333 = vsyncpa [#allocation5], 1
    %s334 = scalar_lea.sflag [#allocation5], 1
    %335 = vsyncpa %s334, 1

</llo_original>
